<compile_context>
chip_gen: v6e
topology: v6e:2x2x1
jax: 0.10.0
libtpu: 0.0.40
codegen_flags: <defaults>
</compile_context>

<pallas_src>
import functools

import jax
import jax.numpy as jnp
from jax.experimental import pallas as pl
from jax.experimental.pallas import tpu as pltpu


# ----------------------------------------------------------------------------
# Bilinear interpolation operators (PyTorch align_corners=False, antialias=False)
# ----------------------------------------------------------------------------
def _bilinear_matrix(out_size, in_size):
    """[out_size, in_size] row-interpolation matrix (half-pixel centers, edge clamp)."""
    scale = in_size / out_size
    i = jnp.arange(out_size, dtype=jnp.float32)
    src = jnp.maximum((i + 0.5) * scale - 0.5, 0.0)
    i0 = jnp.minimum(jnp.floor(src).astype(jnp.int32), in_size - 1)
    i1 = jnp.minimum(i0 + 1, in_size - 1)
    l1 = src - i0.astype(jnp.float32)
    l0 = 1.0 - l1
    return (jax.nn.one_hot(i0, in_size, dtype=jnp.float32) * l0[:, None]
            + jax.nn.one_hot(i1, in_size, dtype=jnp.float32) * l1[:, None])


def _resize_matrix(size, H, W):
    """Combined separable operator R[h*W+w, i*size+j] = Lh[i,h] * Lw[j,w]."""
    lh = _bilinear_matrix(size, H)   # (S, H)
    lw = _bilinear_matrix(size, W)   # (S, W)
    return jnp.einsum('ih,jw->hwij', lh, lw).reshape(H * W, size * size)


# ----------------------------------------------------------------------------
# Fused kernel: 1x1 conv (VPU) + log-softmax + bilinear resize (one MXU matmul)
# ----------------------------------------------------------------------------
def fused_kernel(x_ref, w_ref, b_ref, r_ref, o_ref):
    # x_ref: (B_blk, C_in, HW) f32   lane-dense spatial axis
    # w_ref: (NP, C_in) f32          classes padded to a sublane multiple (pad rows = 0)
    # b_ref: (NP, 1)   f32           pad rows = -1e30 so they vanish in the softmax
    # r_ref: (HW, S*S) bf16          grid-invariant combined bilinear operator
    # o_ref: (B_blk*NP, S*S) f32     lane-dense output (padded class rows sliced off outside)
    b_blk = x_ref.shape[0]
    c_in = x_ref.shape[1]

    logp_rows = []
    for bi in range(b_blk):                      # tiny static unroll over the fused batch
        xb = x_ref[bi]                           # (C_in, HW)

        # 1x1 conv as unrolled VPU MACs: K=C_in is far too small to feed the MXU.
        logits = w_ref[:, 0:1] * xb[0:1, :]      # (NP,1)*(1,HW) -> (NP,HW)
        for c in range(1, c_in):
            logits = logits + w_ref[:, c:c + 1] * xb[c:c + 1, :]
        logits = logits + b_ref[...]             # padded rows become ~-1e30

        # log-softmax over the class (sublane) axis, all in f32, entirely in VMEM.
        mx = jnp.max(logits, axis=0, keepdims=True)
        z = logits - mx
        lse = jnp.log(jnp.sum(jnp.exp(z), axis=0, keepdims=True))
        logp_rows.append(z - lse)                # (NP, HW)

    logp_f32 = logp_rows[0] if b_blk == 1 else jnp.concatenate(logp_rows, axis=0)

    # Bilinear resize as a single MXU matmul with batch fused into M:
    # (B_blk*NP, HW) bf16 @ (HW, S*S) bf16 -> f32. Lane-dense (S*S) store.
    o_ref[...] = jnp.dot(logp_f32.astype(jnp.bfloat16), r_ref[...],
                         preferred_element_type=jnp.float32).astype(o_ref.dtype)


# ----------------------------------------------------------------------------
# Module forward
# ----------------------------------------------------------------------------
@functools.partial(jax.jit, static_argnames=("size", "batch_block"))
def resize_and_classify(x_nchw, w, b, *, size, batch_block=None):
    # x_nchw: [B, C_in, H, W]; w: [n_classes, C_in] (PyTorch conv weight squeezed);
    # b: [n_classes]. Returns [B, n_classes, size, size] (f32).
    B, C_in, H, W = x_nchw.shape
    n_classes = w.shape[0]
    HW = H * W
    S2 = size * size
    NP = ((n_classes + 7) // 8) * 8          # pad class dim to a sublane multiple

    # Shape-dependent batching: small B -> grid=(1,) (R fetched once, max fused M);
    # larger B -> two blocks so both TensorCores (v7x) get work.
    if batch_block is None:
        batch_block = B if B <= 4 else -(-B // 2)
    assert B % batch_block == 0, "wrapper requires B % batch_block == 0"
    num_blocks = B // batch_block

    # Dense kron operator guard.
    # TODO(synk): switch to the separable two-matmul (Lh then Lw) form or tile R over
    # the S*S axis once HW*S2 outgrows the VMEM budget (hits v7x's 64 MiB first).
    if HW * S2 * 2 > 8 * 1024 * 1024:
        raise NotImplementedError("dense-kron resize operator too large; use separable form")

    x_rows = x_nchw.reshape(B, C_in, HW).astype(jnp.float32)   # pure reshape, no transpose
    w_pad = jnp.zeros((NP, C_in), jnp.float32).at[:n_classes].set(w.astype(jnp.float32))
    b_pad = jnp.full((NP, 1), -1e30, jnp.float32).at[:n_classes, 0].set(b.astype(jnp.float32))
    # bf16 R: halves HBM traffic + VMEM footprint; exact for dyadic scale factors (16->32).
    rmat = _resize_matrix(size, H, W).astype(jnp.bfloat16)     # (HW, S*S), const-folded

    # Grid-invariant inputs only need one buffer when there is more than one grid step.
    invariant = dict(pipeline_mode=pl.Buffered(1)) if num_blocks > 1 else {}

    out_flat = pl.pallas_call(
        fused_kernel,
        out_shape=jax.ShapeDtypeStruct((B * NP, S2), jnp.float32),
        grid_spec=pltpu.PrefetchScalarGridSpec(
            num_scalar_prefetch=0,
            grid=(num_blocks,),
            in_specs=[
                pl.BlockSpec((batch_block, C_in, HW), lambda i: (i, 0, 0)),
                pl.BlockSpec((NP, C_in), lambda i: (0, 0), **invariant),
                pl.BlockSpec((NP, 1), lambda i: (0, 0), **invariant),
                pl.BlockSpec((HW, S2), lambda i: (0, 0), **invariant),
            ],
            out_specs=pl.BlockSpec((batch_block * NP, S2), lambda i: (i, 0)),
        ),
        compiler_params=pltpu.CompilerParams(
            dimension_semantics=("parallel",)),
    )(x_rows, w_pad, b_pad, rmat)

    # Drop padded class rows; reshapes are free (contiguous splits).
    return out_flat.reshape(B, NP, size, size)[:, :n_classes]


# Pure-JAX reference (same semantics as the PyTorch module), all f32.
def reference(x, w, b, size):
    logits = jnp.einsum('nc,bchw->bnhw', w, x) + b[None, :, None, None]
    logp = jax.nn.log_softmax(logits, axis=1)
    lh = _bilinear_matrix(size, x.shape[2])
    lw = _bilinear_matrix(size, x.shape[3])
    return jnp.einsum('ih,jw,bnhw->bnij', lh, lw, logp)


if __name__ == "__main__":
    B, DIM, H, W = 2, 4, 16, 16
    N_CLASSES = 6
    SIZE = 32

    key = jax.random.PRNGKey(0)
    kx, kw, kb = jax.random.split(key, 3)

    x = jax.random.normal(kx, (B, DIM, H, W), dtype=jnp.float32)
    # Conv2d(dim, n_classes, (1,1)) weight [n_classes, dim, 1, 1] -> [n_classes, dim]
    w = jax.random.normal(kw, (N_CLASSES, DIM), dtype=jnp.float32) * 0.1
    b = jax.random.normal(kb, (N_CLASSES,), dtype=jnp.float32) * 0.1

    out = resize_and_classify(x, w, b, size=SIZE)
    jax.block_until_ready(out)
    assert out.shape == (B, N_CLASSES, SIZE, SIZE)

    ref = reference(x, w, b, SIZE)
    err = float(jnp.max(jnp.abs(out - ref)))
    # bf16 R is exact for the 2x upsample; the only deliberate low-precision step is the
    # bf16 cast of logp feeding the resize matmul (~2^-9 relative), hence the 2e-2 bound.
    assert err < 2e-2, err
    print("KERNEL_OK")
</pallas_src>

<mosaic_0001>
module attributes {stable_mosaic.version = 11 : i64} {
  func.func @fused_kernel(%arg0: i32, %arg1: memref<2x4x256xf32, #tpu.memory_space<vmem>>, %arg2: memref<8x4xf32, #tpu.memory_space<vmem>>, %arg3: memref<8x1xf32, #tpu.memory_space<vmem>>, %arg4: memref<256x1024xbf16, #tpu.memory_space<vmem>>, %arg5: memref<16x1024xf32, #tpu.memory_space<vmem>>) attributes {dimension_semantics = [#tpu.dimension_semantics<parallel>], iteration_bounds = array<i64: 1>, scalar_prefetch = 0 : i64, scratch_operands = 0 : i64, tpu.core_type = #tpu.core_type<tc>, window_params = [{transform_indices = @transform_0, window_bounds = array<i64: 2, 4, 256>}, {pipeline_mode = #tpu.pipeline_mode<synchronous>, transform_indices = @transform_1, window_bounds = array<i64: 8, 4>}, {pipeline_mode = #tpu.pipeline_mode<synchronous>, transform_indices = @transform_2, window_bounds = array<i64: 8, 1>}, {pipeline_mode = #tpu.pipeline_mode<synchronous>, transform_indices = @transform_3, window_bounds = array<i64: 256, 1024>}, {transform_indices = @transform_4, window_bounds = array<i64: 16, 1024>}]} {
    %c0 = arith.constant 0 : index
    %c0_0 = arith.constant 0 : index
    %c0_1 = arith.constant 0 : index
    %0 = vector.load %arg1[%c0, %c0_0, %c0_1] : memref<2x4x256xf32, #tpu.memory_space<vmem>>, vector<1x4x256xf32>
    %1 = vector.shape_cast %0 : vector<1x4x256xf32> to vector<4x256xf32>
    %c0_2 = arith.constant 0 : index
    %c0_3 = arith.constant 0 : index
    %2 = vector.load %arg2[%c0_2, %c0_3] : memref<8x4xf32, #tpu.memory_space<vmem>>, vector<8x1xf32>
    %3 = vector.extract_strided_slice %1 {offsets = [0, 0], sizes = [1, 256], strides = [1, 1]} : vector<4x256xf32> to vector<1x256xf32>
    %4 = vector.broadcast %2 : vector<8x1xf32> to vector<8x256xf32>
    %5 = vector.broadcast %3 : vector<1x256xf32> to vector<8x256xf32>
    %6 = arith.mulf %4, %5 : vector<8x256xf32>
    %c0_4 = arith.constant 0 : index
    %c1 = arith.constant 1 : index
    %7 = vector.load %arg2[%c0_4, %c1] : memref<8x4xf32, #tpu.memory_space<vmem>>, vector<8x1xf32>
    %8 = vector.extract_strided_slice %1 {offsets = [1, 0], sizes = [1, 256], strides = [1, 1]} : vector<4x256xf32> to vector<1x256xf32>
    %9 = vector.broadcast %7 : vector<8x1xf32> to vector<8x256xf32>
    %10 = vector.broadcast %8 : vector<1x256xf32> to vector<8x256xf32>
    %11 = arith.mulf %9, %10 : vector<8x256xf32>
    %12 = arith.addf %6, %11 : vector<8x256xf32>
    %c0_5 = arith.constant 0 : index
    %c2 = arith.constant 2 : index
    %13 = vector.load %arg2[%c0_5, %c2] : memref<8x4xf32, #tpu.memory_space<vmem>>, vector<8x1xf32>
    %14 = vector.extract_strided_slice %1 {offsets = [2, 0], sizes = [1, 256], strides = [1, 1]} : vector<4x256xf32> to vector<1x256xf32>
    %15 = vector.broadcast %13 : vector<8x1xf32> to vector<8x256xf32>
    %16 = vector.broadcast %14 : vector<1x256xf32> to vector<8x256xf32>
    %17 = arith.mulf %15, %16 : vector<8x256xf32>
    %18 = arith.addf %12, %17 : vector<8x256xf32>
    %c0_6 = arith.constant 0 : index
    %c3 = arith.constant 3 : index
    %19 = vector.load %arg2[%c0_6, %c3] : memref<8x4xf32, #tpu.memory_space<vmem>>, vector<8x1xf32>
    %20 = vector.extract_strided_slice %1 {offsets = [3, 0], sizes = [1, 256], strides = [1, 1]} : vector<4x256xf32> to vector<1x256xf32>
    %21 = vector.broadcast %19 : vector<8x1xf32> to vector<8x256xf32>
    %22 = vector.broadcast %20 : vector<1x256xf32> to vector<8x256xf32>
    %23 = arith.mulf %21, %22 : vector<8x256xf32>
    %24 = arith.addf %18, %23 : vector<8x256xf32>
    %c0_7 = arith.constant 0 : index
    %c0_8 = arith.constant 0 : index
    %25 = vector.load %arg3[%c0_7, %c0_8] : memref<8x1xf32, #tpu.memory_space<vmem>>, vector<8x1xf32>
    %26 = vector.broadcast %25 : vector<8x1xf32> to vector<8x256xf32>
    %27 = arith.addf %24, %26 : vector<8x256xf32>
    %cst = arith.constant dense<0xFF800000> : vector<256xf32>
    %28 = vector.multi_reduction <maximumf>, %27, %cst [0] : vector<8x256xf32> to vector<256xf32>
    %29 = vector.shape_cast %28 : vector<256xf32> to vector<1x256xf32>
    %30 = vector.broadcast %29 : vector<1x256xf32> to vector<8x256xf32>
    %31 = arith.subf %27, %30 : vector<8x256xf32>
    %32 = math.exp %31 : vector<8x256xf32>
    %cst_9 = arith.constant dense<0.000000e+00> : vector<256xf32>
    %33 = vector.multi_reduction <add>, %32, %cst_9 [0] : vector<8x256xf32> to vector<256xf32>
    %34 = vector.shape_cast %33 : vector<256xf32> to vector<1x256xf32>
    %35 = math.log %34 : vector<1x256xf32>
    %36 = vector.broadcast %35 : vector<1x256xf32> to vector<8x256xf32>
    %37 = arith.subf %31, %36 : vector<8x256xf32>
    %c1_10 = arith.constant 1 : index
    %c0_11 = arith.constant 0 : index
    %c0_12 = arith.constant 0 : index
    %38 = vector.load %arg1[%c1_10, %c0_11, %c0_12] : memref<2x4x256xf32, #tpu.memory_space<vmem>>, vector<1x4x256xf32>
    %39 = vector.shape_cast %38 : vector<1x4x256xf32> to vector<4x256xf32>
    %c0_13 = arith.constant 0 : index
    %c0_14 = arith.constant 0 : index
    %40 = vector.load %arg2[%c0_13, %c0_14] : memref<8x4xf32, #tpu.memory_space<vmem>>, vector<8x1xf32>
    %41 = vector.extract_strided_slice %39 {offsets = [0, 0], sizes = [1, 256], strides = [1, 1]} : vector<4x256xf32> to vector<1x256xf32>
    %42 = vector.broadcast %40 : vector<8x1xf32> to vector<8x256xf32>
    %43 = vector.broadcast %41 : vector<1x256xf32> to vector<8x256xf32>
    %44 = arith.mulf %42, %43 : vector<8x256xf32>
    %c0_15 = arith.constant 0 : index
    %c1_16 = arith.constant 1 : index
    %45 = vector.load %arg2[%c0_15, %c1_16] : memref<8x4xf32, #tpu.memory_space<vmem>>, vector<8x1xf32>
    %46 = vector.extract_strided_slice %39 {offsets = [1, 0], sizes = [1, 256], strides = [1, 1]} : vector<4x256xf32> to vector<1x256xf32>
    %47 = vector.broadcast %45 : vector<8x1xf32> to vector<8x256xf32>
    %48 = vector.broadcast %46 : vector<1x256xf32> to vector<8x256xf32>
    %49 = arith.mulf %47, %48 : vector<8x256xf32>
    %50 = arith.addf %44, %49 : vector<8x256xf32>
    %c0_17 = arith.constant 0 : index
    %c2_18 = arith.constant 2 : index
    %51 = vector.load %arg2[%c0_17, %c2_18] : memref<8x4xf32, #tpu.memory_space<vmem>>, vector<8x1xf32>
    %52 = vector.extract_strided_slice %39 {offsets = [2, 0], sizes = [1, 256], strides = [1, 1]} : vector<4x256xf32> to vector<1x256xf32>
    %53 = vector.broadcast %51 : vector<8x1xf32> to vector<8x256xf32>
    %54 = vector.broadcast %52 : vector<1x256xf32> to vector<8x256xf32>
    %55 = arith.mulf %53, %54 : vector<8x256xf32>
    %56 = arith.addf %50, %55 : vector<8x256xf32>
    %c0_19 = arith.constant 0 : index
    %c3_20 = arith.constant 3 : index
    %57 = vector.load %arg2[%c0_19, %c3_20] : memref<8x4xf32, #tpu.memory_space<vmem>>, vector<8x1xf32>
    %58 = vector.extract_strided_slice %39 {offsets = [3, 0], sizes = [1, 256], strides = [1, 1]} : vector<4x256xf32> to vector<1x256xf32>
    %59 = vector.broadcast %57 : vector<8x1xf32> to vector<8x256xf32>
    %60 = vector.broadcast %58 : vector<1x256xf32> to vector<8x256xf32>
    %61 = arith.mulf %59, %60 : vector<8x256xf32>
    %62 = arith.addf %56, %61 : vector<8x256xf32>
    %c0_21 = arith.constant 0 : index
    %c0_22 = arith.constant 0 : index
    %63 = vector.load %arg3[%c0_21, %c0_22] : memref<8x1xf32, #tpu.memory_space<vmem>>, vector<8x1xf32>
    %64 = vector.broadcast %63 : vector<8x1xf32> to vector<8x256xf32>
    %65 = arith.addf %62, %64 : vector<8x256xf32>
    %cst_23 = arith.constant dense<0xFF800000> : vector<256xf32>
    %66 = vector.multi_reduction <maximumf>, %65, %cst_23 [0] : vector<8x256xf32> to vector<256xf32>
    %67 = vector.shape_cast %66 : vector<256xf32> to vector<1x256xf32>
    %68 = vector.broadcast %67 : vector<1x256xf32> to vector<8x256xf32>
    %69 = arith.subf %65, %68 : vector<8x256xf32>
    %70 = math.exp %69 : vector<8x256xf32>
    %cst_24 = arith.constant dense<0.000000e+00> : vector<256xf32>
    %71 = vector.multi_reduction <add>, %70, %cst_24 [0] : vector<8x256xf32> to vector<256xf32>
    %72 = vector.shape_cast %71 : vector<256xf32> to vector<1x256xf32>
    %73 = math.log %72 : vector<1x256xf32>
    %74 = vector.broadcast %73 : vector<1x256xf32> to vector<8x256xf32>
    %75 = arith.subf %69, %74 : vector<8x256xf32>
    %76 = tpu.concatenate %37, %75 in 0 : vector<8x256xf32>, vector<8x256xf32> -> vector<16x256xf32>
    %77 = arith.truncf %76 : vector<16x256xf32> to vector<16x256xbf16>
    %c0_25 = arith.constant 0 : index
    %c0_26 = arith.constant 0 : index
    %78 = vector.load %arg4[%c0_25, %c0_26] : memref<256x1024xbf16, #tpu.memory_space<vmem>>, vector<256x1024xbf16>
    %cst_27 = arith.constant dense<0.000000e+00> : vector<16x1024xf32>
    %79 = tpu.matmul %77, %78, %cst_27 {dimension_numbers = #tpu.dot_dimension_numbers<[1], [0], [0], [1], [0, 0, 1, 1], [], []>} : vector<16x256xbf16>, vector<256x1024xbf16>, vector<16x1024xf32> -> vector<16x1024xf32>
    %c0_28 = arith.constant 0 : index
    %c0_29 = arith.constant 0 : index
    %80 = vector.load %arg5[%c0_28, %c0_29] : memref<16x1024xf32, #tpu.memory_space<vmem>>, vector<16x1024xf32>
    tpu.vector_store %arg5[%c0_28, %c0_29], %79 {strides = array<i32>} : memref<16x1024xf32, #tpu.memory_space<vmem>>, vector<16x1024xf32>,
    return
  }
  func.func @transform_0(%arg0: i32) -> (i32, i32, i32) {
    %c0_i32 = arith.constant 0 : i32
    %c0_i32_0 = arith.constant 0 : i32
    %c0_i32_1 = arith.constant 0 : i32
    return %arg0, %c0_i32, %c0_i32_0 : i32, i32, i32
  }
  func.func @transform_1(%arg0: i32) -> (i32, i32) {
    %c0_i32 = arith.constant 0 : i32
    %c0_i32_0 = arith.constant 0 : i32
    %c0_i32_1 = arith.constant 0 : i32
    return %c0_i32, %c0_i32_0 : i32, i32
  }
  func.func @transform_2(%arg0: i32) -> (i32, i32) {
    %c0_i32 = arith.constant 0 : i32
    %c0_i32_0 = arith.constant 0 : i32
    %c0_i32_1 = arith.constant 0 : i32
    return %c0_i32, %c0_i32_0 : i32, i32
  }
  func.func @transform_3(%arg0: i32) -> (i32, i32) {
    %c0_i32 = arith.constant 0 : i32
    %c0_i32_0 = arith.constant 0 : i32
    %c0_i32_1 = arith.constant 0 : i32
    return %c0_i32, %c0_i32_0 : i32, i32
  }
  func.func @transform_4(%arg0: i32) -> (i32, i32) {
    %c0_i32 = arith.constant 0 : i32
    %c0_i32_0 = arith.constant 0 : i32
    return %arg0, %c0_i32 : i32, i32
  }
}

</mosaic_0001>

<llo_original>
// kernel: resize_and_classify.1
$region0: #{resize_and_classify.1}
  #allocation0 [shape = 'u32[]', space=smem, size = 0x4, offset = 0x4, fixed_abs, tag = 'smem constant byte address 0x4 - core index']
  #allocation1 [shape = 'u32[144,128]{1,0:T(1,128)}', space=vmem, size = 0x12000, scoped, tag = 'internal scratch']
  %s0 = inlined_call_operand.vmem [shape: f32[2,4,256], index: 0, kind: input, shape index: {}]
  %s1 = inlined_call_operand.vmem [shape: f32[8,4], index: 1, kind: input, shape index: {}]
  %s2 = inlined_call_operand.vmem [shape: f32[8,1], index: 2, kind: input, shape index: {}]
  %s3 = inlined_call_operand.vmem [shape: bf16[256,1024], index: 3, kind: input, shape index: {}]
  %s4 = inlined_call_operand.vmem [shape: f32[16,1024], index: 4, kind: output, shape index: {}]
  %s5 = sld [smem:[#allocation0]]
  $region26: #{resize_and_classify.1} parent=0
    _
  %s7 = ssub.s32 1, %s5
  %s8 = scalar_select 0, %s7, %s5
  // Predicated region
  $region2: #{resize_and_classify.1} parent=0 // pred_check
    _
  $region3: #{resize_and_classify.1} parent=0 // pred_check_branch
    %10 = sbr.rel (0) target = $region5
  $region4: #{resize_and_classify.1} parent=0 // pred_region
    _
  $region5: #{resize_and_classify.1} parent=0 // pred_fallthru
    _
  // Predicated region
  $region6: #{resize_and_classify.1} parent=0 // pred_check
    _
  $region7: #{resize_and_classify.1} parent=0 // pred_check_branch
    %12 = sbr.rel (0) target = $region9
  $region8: #{resize_and_classify.1} parent=0 // pred_region
    _
  $region9: #{resize_and_classify.1} parent=0 // pred_fallthru
    _
  // Predicated region
  $region10: #{resize_and_classify.1} parent=0 // pred_check
    _
  $region11: #{resize_and_classify.1} parent=0 // pred_check_branch
    %14 = sbr.rel (0) target = $region13
  $region12: #{resize_and_classify.1} parent=0 // pred_region
    _
  $region13: #{resize_and_classify.1} parent=0 // pred_fallthru
    _
  // Predicated region
  $region14: #{resize_and_classify.1} parent=0 // pred_check
    _
  $region15: #{resize_and_classify.1} parent=0 // pred_check_branch
    %16 = sbr.rel (0) target = $region17
  $region16: #{resize_and_classify.1} parent=0 // pred_region
    _
  $region17: #{resize_and_classify.1} parent=0 // pred_fallthru
    _
  %v17 = vld [vmem:[%s0] sm:$0xff]
  %v18 = vld [vmem:[%s1] sm:$0xff]
  %20 = vset.pattern.permute.xlu0 0
  %21 = vperm.xlu0 %20, %v18
  %v22 = vpop.permute.xlu0 %21
  %v25 = vlaneseq
  %v26 = vshrl.u32 %v25, 7
  %v27 = vsub.s32 0, %v26
  %v28 = vrot.slane %v17, %v27
  %v29 = vlaneseq
  %v30 = vshrl.u32 %v29, 7
  %v31 = vsub.s32 4, %v30
  %v32 = vrot.slane %v17, %v31
  %v35 = vlaneseq
  %v36 = vshrl.u32 %v35, 7
  %v37 = vsub.s32 0, %v36
  %v38 = vrot.slane %v28, %v37
  %v39 = vlaneseq
  %v40 = vshrl.u32 %v39, 7
  %v41 = vsub.s32 0, %v40
  %v42 = vrot.slane %v32, %v41
  %v43 = vmul.f32 %v22, %v38
  %v44 = vmul.f32 %v22, %v42
  %45 = vset.pattern.permute.xlu0 1
  %46 = vperm.xlu0 %45, %v18
  %v47 = vpop.permute.xlu0 %46
  %v49 = vlaneseq
  %v50 = vshrl.u32 %v49, 7
  %v51 = vsub.s32 1, %v50
  %v52 = vrot.slane %v17, %v51
  %v53 = vlaneseq
  %v54 = vshrl.u32 %v53, 7
  %v55 = vsub.s32 5, %v54
  %v56 = vrot.slane %v17, %v55
  %v59 = vlaneseq
  %v60 = vshrl.u32 %v59, 7
  %v61 = vsub.s32 1, %v60
  %v62 = vrot.slane %v52, %v61
  %v63 = vlaneseq
  %v64 = vshrl.u32 %v63, 7
  %v65 = vsub.s32 1, %v64
  %v66 = vrot.slane %v56, %v65
  %v67 = vmul.f32 %v47, %v62
  %v68 = vmul.f32 %v47, %v66
  %v69 = vadd.f32 %v43, %v67
  %v70 = vadd.f32 %v44, %v68
  %71 = vset.pattern.permute.xlu0 2
  %72 = vperm.xlu0 %71, %v18
  %v73 = vpop.permute.xlu0 %72
  %v75 = vlaneseq
  %v76 = vshrl.u32 %v75, 7
  %v77 = vsub.s32 2, %v76
  %v78 = vrot.slane %v17, %v77
  %v79 = vlaneseq
  %v80 = vshrl.u32 %v79, 7
  %v81 = vsub.s32 6, %v80
  %v82 = vrot.slane %v17, %v81
  %v85 = vlaneseq
  %v86 = vshrl.u32 %v85, 7
  %v87 = vsub.s32 2, %v86
  %v88 = vrot.slane %v78, %v87
  %v89 = vlaneseq
  %v90 = vshrl.u32 %v89, 7
  %v91 = vsub.s32 2, %v90
  %v92 = vrot.slane %v82, %v91
  %v93 = vmul.f32 %v73, %v88
  %v94 = vmul.f32 %v73, %v92
  %v95 = vadd.f32 %v69, %v93
  %v96 = vadd.f32 %v70, %v94
  %97 = vset.pattern.permute.xlu0 3
  %98 = vperm.xlu0 %97, %v18
  %v99 = vpop.permute.xlu0 %98
  %v101 = vlaneseq
  %v102 = vshrl.u32 %v101, 7
  %v103 = vsub.s32 3, %v102
  %v104 = vrot.slane %v17, %v103
  %v105 = vlaneseq
  %v106 = vshrl.u32 %v105, 7
  %v107 = vsub.s32 7, %v106
  %v108 = vrot.slane %v17, %v107
  %v111 = vlaneseq
  %v112 = vshrl.u32 %v111, 7
  %v113 = vsub.s32 3, %v112
  %v114 = vrot.slane %v104, %v113
  %v115 = vlaneseq
  %v116 = vshrl.u32 %v115, 7
  %v117 = vsub.s32 3, %v116
  %v118 = vrot.slane %v108, %v117
  %v119 = vmul.f32 %v99, %v114
  %v120 = vmul.f32 %v99, %v118
  %v121 = vadd.f32 %v95, %v119
  %v122 = vadd.f32 %v96, %v120
  %v123 = vld [vmem:[%s2] sm:$0xff]
  %125 = vset.pattern.permute.xlu0 0
  %126 = vperm.xlu0 %125, %v123
  %v127 = vpop.permute.xlu0 %126
  %v129 = vadd.f32 %v121, %v127
  %v130 = vadd.f32 %v122, %v127
  %v131 = vrot.slane %v129, 4
  %v132 = vmax.f32 %v129, %v131
  %v133 = vrot.slane %v132, 2
  %v134 = vmax.f32 %v132, %v133
  %v135 = vrot.slane %v134, 1
  %v136 = vmax.f32 %v134, %v135
  %v137 = vrot.slane %v130, 4
  %v138 = vmax.f32 %v130, %v137
  %v139 = vrot.slane %v138, 2
  %v140 = vmax.f32 %v138, %v139
  %v141 = vrot.slane %v140, 1
  %v142 = vmax.f32 %v140, %v141
  %v143 = vsub.f32 %v129, %v136
  %v144 = vsub.f32 %v130, %v142
  %v145 = vmul.f32 %v143, 1.442695
  %v146 = vpow.pop %v145
  %v147 = vmul.f32 %v144, 1.442695
  %v148 = vpow.pop %v147
  %v149 = vrot.slane %v146, 4
  %v150 = vadd.f32 %v146, %v149
  %v151 = vrot.slane %v150, 2
  %v152 = vadd.f32 %v150, %v151
  %v153 = vrot.slane %v152, 1
  %v154 = vadd.f32 %v152, %v153
  %v155 = vrot.slane %v148, 4
  %v156 = vadd.f32 %v148, %v155
  %v157 = vrot.slane %v156, 2
  %v158 = vadd.f32 %v156, %v157
  %v159 = vrot.slane %v158, 1
  %v160 = vadd.f32 %v158, %v159
  %v161 = vlog2.pop %v154
  %v162 = vmul.f32 %v161, 0.6931472
  %v163 = vlog2.pop %v160
  %v164 = vmul.f32 %v163, 0.6931472
  %v165 = vsub.f32 %v143, %v162
  %v166 = vsub.f32 %v144, %v164
  %s167 = scalar_lea.vmem %s0, 8
  %v168 = vld [vmem:[%s167] sm:$0xff]
  %v170 = vlaneseq
  %v171 = vshrl.u32 %v170, 7
  %v172 = vsub.s32 0, %v171
  %v173 = vrot.slane %v168, %v172
  %v174 = vlaneseq
  %v175 = vshrl.u32 %v174, 7
  %v176 = vsub.s32 4, %v175
  %v177 = vrot.slane %v168, %v176
  %v180 = vlaneseq
  %v181 = vshrl.u32 %v180, 7
  %v182 = vsub.s32 0, %v181
  %v183 = vrot.slane %v173, %v182
  %v184 = vlaneseq
  %v185 = vshrl.u32 %v184, 7
  %v186 = vsub.s32 0, %v185
  %v187 = vrot.slane %v177, %v186
  %v188 = vmul.f32 %v22, %v183
  %v189 = vmul.f32 %v22, %v187
  %v190 = vlaneseq
  %v191 = vshrl.u32 %v190, 7
  %v192 = vsub.s32 1, %v191
  %v193 = vrot.slane %v168, %v192
  %v194 = vlaneseq
  %v195 = vshrl.u32 %v194, 7
  %v196 = vsub.s32 5, %v195
  %v197 = vrot.slane %v168, %v196
  %v200 = vlaneseq
  %v201 = vshrl.u32 %v200, 7
  %v202 = vsub.s32 1, %v201
  %v203 = vrot.slane %v193, %v202
  %v204 = vlaneseq
  %v205 = vshrl.u32 %v204, 7
  %v206 = vsub.s32 1, %v205
  %v207 = vrot.slane %v197, %v206
  %v208 = vmul.f32 %v47, %v203
  %v209 = vmul.f32 %v47, %v207
  %v210 = vadd.f32 %v188, %v208
  %v211 = vadd.f32 %v189, %v209
  %v212 = vlaneseq
  %v213 = vshrl.u32 %v212, 7
  %v214 = vsub.s32 2, %v213
  %v215 = vrot.slane %v168, %v214
  %v216 = vlaneseq
  %v217 = vshrl.u32 %v216, 7
  %v218 = vsub.s32 6, %v217
  %v219 = vrot.slane %v168, %v218
  %v222 = vlaneseq
  %v223 = vshrl.u32 %v222, 7
  %v224 = vsub.s32 2, %v223
  %v225 = vrot.slane %v215, %v224
  %v226 = vlaneseq
  %v227 = vshrl.u32 %v226, 7
  %v228 = vsub.s32 2, %v227
  %v229 = vrot.slane %v219, %v228
  %v230 = vmul.f32 %v73, %v225
  %v231 = vmul.f32 %v73, %v229
  %v232 = vadd.f32 %v210, %v230
  %v233 = vadd.f32 %v211, %v231
  %v234 = vlaneseq
  %v235 = vshrl.u32 %v234, 7
  %v236 = vsub.s32 3, %v235
  %v237 = vrot.slane %v168, %v236
  %v238 = vlaneseq
  %v239 = vshrl.u32 %v238, 7
  %v240 = vsub.s32 7, %v239
  %v241 = vrot.slane %v168, %v240
  %v244 = vlaneseq
  %v245 = vshrl.u32 %v244, 7
  %v246 = vsub.s32 3, %v245
  %v247 = vrot.slane %v237, %v246
  %v248 = vlaneseq
  %v249 = vshrl.u32 %v248, 7
  %v250 = vsub.s32 3, %v249
  %v251 = vrot.slane %v241, %v250
  %v252 = vmul.f32 %v99, %v247
  %v253 = vmul.f32 %v99, %v251
  %v254 = vadd.f32 %v232, %v252
  %v255 = vadd.f32 %v233, %v253
  %v256 = vadd.f32 %v254, %v127
  %v257 = vadd.f32 %v255, %v127
  %v258 = vrot.slane %v256, 4
  %v259 = vmax.f32 %v256, %v258
  %v260 = vrot.slane %v259, 2
  %v261 = vmax.f32 %v259, %v260
  %v262 = vrot.slane %v261, 1
  %v263 = vmax.f32 %v261, %v262
  %v264 = vrot.slane %v257, 4
  %v265 = vmax.f32 %v257, %v264
  %v266 = vrot.slane %v265, 2
  %v267 = vmax.f32 %v265, %v266
  %v268 = vrot.slane %v267, 1
  %v269 = vmax.f32 %v267, %v268
  %v270 = vsub.f32 %v256, %v263
  %v271 = vsub.f32 %v257, %v269
  %v272 = vmul.f32 %v270, 1.442695
  %v273 = vpow.pop %v272
  %v274 = vmul.f32 %v271, 1.442695
  %v275 = vpow.pop %v274
  %v276 = vrot.slane %v273, 4
  %v277 = vadd.f32 %v273, %v276
  %v278 = vrot.slane %v277, 2
  %v279 = vadd.f32 %v277, %v278
  %v280 = vrot.slane %v279, 1
  %v281 = vadd.f32 %v279, %v280
  %v282 = vrot.slane %v275, 4
  %v283 = vadd.f32 %v275, %v282
  %v284 = vrot.slane %v283, 2
  %v285 = vadd.f32 %v283, %v284
  %v286 = vrot.slane %v285, 1
  %v287 = vadd.f32 %v285, %v286
  %v288 = vlog2.pop %v281
  %v289 = vmul.f32 %v288, 0.6931472
  %v290 = vlog2.pop %v287
  %v291 = vmul.f32 %v290, 0.6931472
  %v292 = vsub.f32 %v270, %v289
  %v293 = vsub.f32 %v271, %v291
  %v294 = vpack.c.bf16 %v292, %v165
  %v295 = vpack.c.bf16 %v293, %v166
  %v296 = vld [vmem:[%s3] sm:$0xff]
  %v297 = vld [vmem:[%s3 + $0x8] sm:$0xff]
  %v298 = vld [vmem:[%s3 + $0x10] sm:$0xff]
  %v299 = vld [vmem:[%s3 + $0x18] sm:$0xff]
  %v300 = vld [vmem:[%s3 + $0x20] sm:$0xff]
  %v301 = vld [vmem:[%s3 + $0x28] sm:$0xff]
  %v302 = vld [vmem:[%s3 + $0x30] sm:$0xff]
  %v303 = vld [vmem:[%s3 + $0x38] sm:$0xff]
  %v304 = vld [vmem:[%s3 + $0x40] sm:$0xff]
  %v305 = vld [vmem:[%s3 + $0x48] sm:$0xff]
  %v306 = vld [vmem:[%s3 + $0x50] sm:$0xff]
  %v307 = vld [vmem:[%s3 + $0x58] sm:$0xff]
  %v308 = vld [vmem:[%s3 + $0x60] sm:$0xff]
  %v309 = vld [vmem:[%s3 + $0x68] sm:$0xff]
  %v310 = vld [vmem:[%s3 + $0x70] sm:$0xff]
  %v311 = vld [vmem:[%s3 + $0x78] sm:$0xff]
  %v312 = vld [vmem:[%s3 + $0x80] sm:$0xff]
  %v313 = vld [vmem:[%s3 + $0x88] sm:$0xff]
  %v314 = vld [vmem:[%s3 + $0x90] sm:$0xff]
  %v315 = vld [vmem:[%s3 + $0x98] sm:$0xff]
  %v316 = vld [vmem:[%s3 + $0xa0] sm:$0xff]
  %v317 = vld [vmem:[%s3 + $0xa8] sm:$0xff]
  %v318 = vld [vmem:[%s3 + $0xb0] sm:$0xff]
  %v319 = vld [vmem:[%s3 + $0xb8] sm:$0xff]
  %v320 = vld [vmem:[%s3 + $0xc0] sm:$0xff]
  %v321 = vld [vmem:[%s3 + $0xc8] sm:$0xff]
  %v322 = vld [vmem:[%s3 + $0xd0] sm:$0xff]
  %v323 = vld [vmem:[%s3 + $0xd8] sm:$0xff]
  %v324 = vld [vmem:[%s3 + $0xe0] sm:$0xff]
  %v325 = vld [vmem:[%s3 + $0xe8] sm:$0xff]
  %v326 = vld [vmem:[%s3 + $0xf0] sm:$0xff]
  %v327 = vld [vmem:[%s3 + $0xf8] sm:$0xff]
  %v328 = vld [vmem:[%s3 + $0x100] sm:$0xff]
  %v329 = vld [vmem:[%s3 + $0x108] sm:$0xff]
  %v330 = vld [vmem:[%s3 + $0x110] sm:$0xff]
  %v331 = vld [vmem:[%s3 + $0x118] sm:$0xff]
  %v332 = vld [vmem:[%s3 + $0x120] sm:$0xff]
  %v333 = vld [vmem:[%s3 + $0x128] sm:$0xff]
  %v334 = vld [vmem:[%s3 + $0x130] sm:$0xff]
  %v335 = vld [vmem:[%s3 + $0x138] sm:$0xff]
  %v336 = vld [vmem:[%s3 + $0x140] sm:$0xff]
  %v337 = vld [vmem:[%s3 + $0x148] sm:$0xff]
  %v338 = vld [vmem:[%s3 + $0x150] sm:$0xff]
  %v339 = vld [vmem:[%s3 + $0x158] sm:$0xff]
  %v340 = vld [vmem:[%s3 + $0x160] sm:$0xff]
  %v341 = vld [vmem:[%s3 + $0x168] sm:$0xff]
  %v342 = vld [vmem:[%s3 + $0x170] sm:$0xff]
  %v343 = vld [vmem:[%s3 + $0x178] sm:$0xff]
  %v344 = vld [vmem:[%s3 + $0x180] sm:$0xff]
  %v345 = vld [vmem:[%s3 + $0x188] sm:$0xff]
  %v346 = vld [vmem:[%s3 + $0x190] sm:$0xff]
  %v347 = vld [vmem:[%s3 + $0x198] sm:$0xff]
  %v348 = vld [vmem:[%s3 + $0x1a0] sm:$0xff]
  %v349 = vld [vmem:[%s3 + $0x1a8] sm:$0xff]
  %v350 = vld [vmem:[%s3 + $0x1b0] sm:$0xff]
  %v351 = vld [vmem:[%s3 + $0x1b8] sm:$0xff]
  %v352 = vld [vmem:[%s3 + $0x1c0] sm:$0xff]
  %v353 = vld [vmem:[%s3 + $0x1c8] sm:$0xff]
  %v354 = vld [vmem:[%s3 + $0x1d0] sm:$0xff]
  %v355 = vld [vmem:[%s3 + $0x1d8] sm:$0xff]
  %v356 = vld [vmem:[%s3 + $0x1e0] sm:$0xff]
  %v357 = vld [vmem:[%s3 + $0x1e8] sm:$0xff]
  %v358 = vld [vmem:[%s3 + $0x1f0] sm:$0xff]
  %v359 = vld [vmem:[%s3 + $0x1f8] sm:$0xff]
  %v360 = vld [vmem:[%s3 + $0x200] sm:$0xff]
  %v361 = vld [vmem:[%s3 + $0x208] sm:$0xff]
  %v362 = vld [vmem:[%s3 + $0x210] sm:$0xff]
  %v363 = vld [vmem:[%s3 + $0x218] sm:$0xff]
  %v364 = vld [vmem:[%s3 + $0x220] sm:$0xff]
  %v365 = vld [vmem:[%s3 + $0x228] sm:$0xff]
  %v366 = vld [vmem:[%s3 + $0x230] sm:$0xff]
  %v367 = vld [vmem:[%s3 + $0x238] sm:$0xff]
  %v368 = vld [vmem:[%s3 + $0x240] sm:$0xff]
  %v369 = vld [vmem:[%s3 + $0x248] sm:$0xff]
  %v370 = vld [vmem:[%s3 + $0x250] sm:$0xff]
  %v371 = vld [vmem:[%s3 + $0x258] sm:$0xff]
  %v372 = vld [vmem:[%s3 + $0x260] sm:$0xff]
  %v373 = vld [vmem:[%s3 + $0x268] sm:$0xff]
  %v374 = vld [vmem:[%s3 + $0x270] sm:$0xff]
  %v375 = vld [vmem:[%s3 + $0x278] sm:$0xff]
  %v376 = vld [vmem:[%s3 + $0x280] sm:$0xff]
  %v377 = vld [vmem:[%s3 + $0x288] sm:$0xff]
  %v378 = vld [vmem:[%s3 + $0x290] sm:$0xff]
  %v379 = vld [vmem:[%s3 + $0x298] sm:$0xff]
  %v380 = vld [vmem:[%s3 + $0x2a0] sm:$0xff]
  %v381 = vld [vmem:[%s3 + $0x2a8] sm:$0xff]
  %v382 = vld [vmem:[%s3 + $0x2b0] sm:$0xff]
  %v383 = vld [vmem:[%s3 + $0x2b8] sm:$0xff]
  %v384 = vld [vmem:[%s3 + $0x2c0] sm:$0xff]
  %v385 = vld [vmem:[%s3 + $0x2c8] sm:$0xff]
  %v386 = vld [vmem:[%s3 + $0x2d0] sm:$0xff]
  %v387 = vld [vmem:[%s3 + $0x2d8] sm:$0xff]
  %v388 = vld [vmem:[%s3 + $0x2e0] sm:$0xff]
  %v389 = vld [vmem:[%s3 + $0x2e8] sm:$0xff]
  %v390 = vld [vmem:[%s3 + $0x2f0] sm:$0xff]
  %v391 = vld [vmem:[%s3 + $0x2f8] sm:$0xff]
  %v392 = vld [vmem:[%s3 + $0x300] sm:$0xff]
  %v393 = vld [vmem:[%s3 + $0x308] sm:$0xff]
  %v394 = vld [vmem:[%s3 + $0x310] sm:$0xff]
  %v395 = vld [vmem:[%s3 + $0x318] sm:$0xff]
  %v396 = vld [vmem:[%s3 + $0x320] sm:$0xff]
  %v397 = vld [vmem:[%s3 + $0x328] sm:$0xff]
  %v398 = vld [vmem:[%s3 + $0x330] sm:$0xff]
  %v399 = vld [vmem:[%s3 + $0x338] sm:$0xff]
  %v400 = vld [vmem:[%s3 + $0x340] sm:$0xff]
  %v401 = vld [vmem:[%s3 + $0x348] sm:$0xff]
  %v402 = vld [vmem:[%s3 + $0x350] sm:$0xff]
  %v403 = vld [vmem:[%s3 + $0x358] sm:$0xff]
  %v404 = vld [vmem:[%s3 + $0x360] sm:$0xff]
  %v405 = vld [vmem:[%s3 + $0x368] sm:$0xff]
  %v406 = vld [vmem:[%s3 + $0x370] sm:$0xff]
  %v407 = vld [vmem:[%s3 + $0x378] sm:$0xff]
  %v408 = vld [vmem:[%s3 + $0x380] sm:$0xff]
  %v409 = vld [vmem:[%s3 + $0x388] sm:$0xff]
  %v410 = vld [vmem:[%s3 + $0x390] sm:$0xff]
  %v411 = vld [vmem:[%s3 + $0x398] sm:$0xff]
  %v412 = vld [vmem:[%s3 + $0x3a0] sm:$0xff]
  %v413 = vld [vmem:[%s3 + $0x3a8] sm:$0xff]
  %v414 = vld [vmem:[%s3 + $0x3b0] sm:$0xff]
  %v415 = vld [vmem:[%s3 + $0x3b8] sm:$0xff]
  %v416 = vld [vmem:[%s3 + $0x3c0] sm:$0xff]
  %v417 = vld [vmem:[%s3 + $0x3c8] sm:$0xff]
  %v418 = vld [vmem:[%s3 + $0x3d0] sm:$0xff]
  %v419 = vld [vmem:[%s3 + $0x3d8] sm:$0xff]
  %v420 = vld [vmem:[%s3 + $0x3e0] sm:$0xff]
  %v421 = vld [vmem:[%s3 + $0x3e8] sm:$0xff]
  %v422 = vld [vmem:[%s3 + $0x3f0] sm:$0xff]
  %v423 = vld [vmem:[%s3 + $0x3f8] sm:$0xff]
  %v552 = vunpack.c.l.b16 %v296
  %v553 = vunpack.c.h.b16 %v296
  %v554 = vunpack.c.l.b16 %v297
  %v555 = vunpack.c.h.b16 %v297
  %v556 = vunpack.c.l.b16 %v298
  %v557 = vunpack.c.h.b16 %v298
  %v558 = vunpack.c.l.b16 %v299
  %v559 = vunpack.c.h.b16 %v299
  %v560 = vunpack.c.l.b16 %v300
  %v561 = vunpack.c.h.b16 %v300
  %v562 = vunpack.c.l.b16 %v301
  %v563 = vunpack.c.h.b16 %v301
  %v564 = vunpack.c.l.b16 %v302
  %v565 = vunpack.c.h.b16 %v302
  %v566 = vunpack.c.l.b16 %v303
  %v567 = vunpack.c.h.b16 %v303
  %v568 = vunpack.c.l.b16 %v304
  %v569 = vunpack.c.h.b16 %v304
  %v570 = vunpack.c.l.b16 %v305
  %v571 = vunpack.c.h.b16 %v305
  %v572 = vunpack.c.l.b16 %v306
  %v573 = vunpack.c.h.b16 %v306
  %v574 = vunpack.c.l.b16 %v307
  %v575 = vunpack.c.h.b16 %v307
  %v576 = vunpack.c.l.b16 %v308
  %v577 = vunpack.c.h.b16 %v308
  %v578 = vunpack.c.l.b16 %v309
  %v579 = vunpack.c.h.b16 %v309
  %v580 = vunpack.c.l.b16 %v310
  %v581 = vunpack.c.h.b16 %v310
  %v582 = vunpack.c.l.b16 %v311
  %v583 = vunpack.c.h.b16 %v311
  %v584 = vunpack.c.l.b16 %v312
  %v585 = vunpack.c.h.b16 %v312
  %v586 = vunpack.c.l.b16 %v313
  %v587 = vunpack.c.h.b16 %v313
  %v588 = vunpack.c.l.b16 %v314
  %v589 = vunpack.c.h.b16 %v314
  %v590 = vunpack.c.l.b16 %v315
  %v591 = vunpack.c.h.b16 %v315
  %v592 = vunpack.c.l.b16 %v316
  %v593 = vunpack.c.h.b16 %v316
  %v594 = vunpack.c.l.b16 %v317
  %v595 = vunpack.c.h.b16 %v317
  %v596 = vunpack.c.l.b16 %v318
  %v597 = vunpack.c.h.b16 %v318
  %v598 = vunpack.c.l.b16 %v319
  %v599 = vunpack.c.h.b16 %v319
  %v600 = vunpack.c.l.b16 %v320
  %v601 = vunpack.c.h.b16 %v320
  %v602 = vunpack.c.l.b16 %v321
  %v603 = vunpack.c.h.b16 %v321
  %v604 = vunpack.c.l.b16 %v322
  %v605 = vunpack.c.h.b16 %v322
  %v606 = vunpack.c.l.b16 %v323
  %v607 = vunpack.c.h.b16 %v323
  %v608 = vunpack.c.l.b16 %v324
  %v609 = vunpack.c.h.b16 %v324
  %v610 = vunpack.c.l.b16 %v325
  %v611 = vunpack.c.h.b16 %v325
  %v612 = vunpack.c.l.b16 %v326
  %v613 = vunpack.c.h.b16 %v326
  %v614 = vunpack.c.l.b16 %v327
  %v615 = vunpack.c.h.b16 %v327
  %v616 = vunpack.c.l.b16 %v328
  %v617 = vunpack.c.h.b16 %v328
  %v618 = vunpack.c.l.b16 %v329
  %v619 = vunpack.c.h.b16 %v329
  %v620 = vunpack.c.l.b16 %v330
  %v621 = vunpack.c.h.b16 %v330
  %v622 = vunpack.c.l.b16 %v331
  %v623 = vunpack.c.h.b16 %v331
  %v624 = vunpack.c.l.b16 %v332
  %v625 = vunpack.c.h.b16 %v332
  %v626 = vunpack.c.l.b16 %v333
  %v627 = vunpack.c.h.b16 %v333
  %v628 = vunpack.c.l.b16 %v334
  %v629 = vunpack.c.h.b16 %v334
  %v630 = vunpack.c.l.b16 %v335
  %v631 = vunpack.c.h.b16 %v335
  %v632 = vunpack.c.l.b16 %v336
  %v633 = vunpack.c.h.b16 %v336
  %v634 = vunpack.c.l.b16 %v337
  %v635 = vunpack.c.h.b16 %v337
  %v636 = vunpack.c.l.b16 %v338
  %v637 = vunpack.c.h.b16 %v338
  %v638 = vunpack.c.l.b16 %v339
  %v639 = vunpack.c.h.b16 %v339
  %v640 = vunpack.c.l.b16 %v340
  %v641 = vunpack.c.h.b16 %v340
  %v642 = vunpack.c.l.b16 %v341
  %v643 = vunpack.c.h.b16 %v341
  %v644 = vunpack.c.l.b16 %v342
  %v645 = vunpack.c.h.b16 %v342
  %v646 = vunpack.c.l.b16 %v343
  %v647 = vunpack.c.h.b16 %v343
  %v648 = vunpack.c.l.b16 %v344
  %v649 = vunpack.c.h.b16 %v344
  %v650 = vunpack.c.l.b16 %v345
  %v651 = vunpack.c.h.b16 %v345
  %v652 = vunpack.c.l.b16 %v346
  %v653 = vunpack.c.h.b16 %v346
  %v654 = vunpack.c.l.b16 %v347
  %v655 = vunpack.c.h.b16 %v347
  %v656 = vunpack.c.l.b16 %v348
  %v657 = vunpack.c.h.b16 %v348
  %v658 = vunpack.c.l.b16 %v349
  %v659 = vunpack.c.h.b16 %v349
  %v660 = vunpack.c.l.b16 %v350
  %v661 = vunpack.c.h.b16 %v350
  %v662 = vunpack.c.l.b16 %v351
  %v663 = vunpack.c.h.b16 %v351
  %v664 = vunpack.c.l.b16 %v352
  %v665 = vunpack.c.h.b16 %v352
  %v666 = vunpack.c.l.b16 %v353
  %v667 = vunpack.c.h.b16 %v353
  %v668 = vunpack.c.l.b16 %v354
  %v669 = vunpack.c.h.b16 %v354
  %v670 = vunpack.c.l.b16 %v355
  %v671 = vunpack.c.h.b16 %v355
  %v672 = vunpack.c.l.b16 %v356
  %v673 = vunpack.c.h.b16 %v356
  %v674 = vunpack.c.l.b16 %v357
  %v675 = vunpack.c.h.b16 %v357
  %v676 = vunpack.c.l.b16 %v358
  %v677 = vunpack.c.h.b16 %v358
  %v678 = vunpack.c.l.b16 %v359
  %v679 = vunpack.c.h.b16 %v359
  %v680 = vunpack.c.l.b16 %v360
  %v681 = vunpack.c.h.b16 %v360
  %v682 = vunpack.c.l.b16 %v361
  %v683 = vunpack.c.h.b16 %v361
  %v684 = vunpack.c.l.b16 %v362
  %v685 = vunpack.c.h.b16 %v362
  %v686 = vunpack.c.l.b16 %v363
  %v687 = vunpack.c.h.b16 %v363
  %v688 = vunpack.c.l.b16 %v364
  %v689 = vunpack.c.h.b16 %v364
  %v690 = vunpack.c.l.b16 %v365
  %v691 = vunpack.c.h.b16 %v365
  %v692 = vunpack.c.l.b16 %v366
  %v693 = vunpack.c.h.b16 %v366
  %v694 = vunpack.c.l.b16 %v367
  %v695 = vunpack.c.h.b16 %v367
  %v696 = vunpack.c.l.b16 %v368
  %v697 = vunpack.c.h.b16 %v368
  %v698 = vunpack.c.l.b16 %v369
  %v699 = vunpack.c.h.b16 %v369
  %v700 = vunpack.c.l.b16 %v370
  %v701 = vunpack.c.h.b16 %v370
  %v702 = vunpack.c.l.b16 %v371
  %v703 = vunpack.c.h.b16 %v371
  %v704 = vunpack.c.l.b16 %v372
  %v705 = vunpack.c.h.b16 %v372
  %v706 = vunpack.c.l.b16 %v373
  %v707 = vunpack.c.h.b16 %v373
  %v708 = vunpack.c.l.b16 %v374
  %v709 = vunpack.c.h.b16 %v374
  %v710 = vunpack.c.l.b16 %v375
  %v711 = vunpack.c.h.b16 %v375
  %v712 = vunpack.c.l.b16 %v376
  %v713 = vunpack.c.h.b16 %v376
  %v714 = vunpack.c.l.b16 %v377
  %v715 = vunpack.c.h.b16 %v377
  %v716 = vunpack.c.l.b16 %v378
  %v717 = vunpack.c.h.b16 %v378
  %v718 = vunpack.c.l.b16 %v379
  %v719 = vunpack.c.h.b16 %v379
  %v720 = vunpack.c.l.b16 %v380
  %v721 = vunpack.c.h.b16 %v380
  %v722 = vunpack.c.l.b16 %v381
  %v723 = vunpack.c.h.b16 %v381
  %v724 = vunpack.c.l.b16 %v382
  %v725 = vunpack.c.h.b16 %v382
  %v726 = vunpack.c.l.b16 %v383
  %v727 = vunpack.c.h.b16 %v383
  %v728 = vunpack.c.l.b16 %v384
  %v729 = vunpack.c.h.b16 %v384
  %v730 = vunpack.c.l.b16 %v385
  %v731 = vunpack.c.h.b16 %v385
  %v732 = vunpack.c.l.b16 %v386
  %v733 = vunpack.c.h.b16 %v386
  %v734 = vunpack.c.l.b16 %v387
  %v735 = vunpack.c.h.b16 %v387
  %v736 = vunpack.c.l.b16 %v388
  %v737 = vunpack.c.h.b16 %v388
  %v738 = vunpack.c.l.b16 %v389
  %v739 = vunpack.c.h.b16 %v389
  %v740 = vunpack.c.l.b16 %v390
  %v741 = vunpack.c.h.b16 %v390
  %v742 = vunpack.c.l.b16 %v391
  %v743 = vunpack.c.h.b16 %v391
  %v744 = vunpack.c.l.b16 %v392
  %v745 = vunpack.c.h.b16 %v392
  %v746 = vunpack.c.l.b16 %v393
  %v747 = vunpack.c.h.b16 %v393
  %v748 = vunpack.c.l.b16 %v394
  %v749 = vunpack.c.h.b16 %v394
  %v750 = vunpack.c.l.b16 %v395
  %v751 = vunpack.c.h.b16 %v395
  %v752 = vunpack.c.l.b16 %v396
  %v753 = vunpack.c.h.b16 %v396
  %v754 = vunpack.c.l.b16 %v397
  %v755 = vunpack.c.h.b16 %v397
  %v756 = vunpack.c.l.b16 %v398
  %v757 = vunpack.c.h.b16 %v398
  %v758 = vunpack.c.l.b16 %v399
  %v759 = vunpack.c.h.b16 %v399
  %v760 = vunpack.c.l.b16 %v400
  %v761 = vunpack.c.h.b16 %v400
  %v762 = vunpack.c.l.b16 %v401
  %v763 = vunpack.c.h.b16 %v401
  %v764 = vunpack.c.l.b16 %v402
  %v765 = vunpack.c.h.b16 %v402
  %v766 = vunpack.c.l.b16 %v403
  %v767 = vunpack.c.h.b16 %v403
  %v768 = vunpack.c.l.b16 %v404
  %v769 = vunpack.c.h.b16 %v404
  %v770 = vunpack.c.l.b16 %v405
  %v771 = vunpack.c.h.b16 %v405
  %v772 = vunpack.c.l.b16 %v406
  %v773 = vunpack.c.h.b16 %v406
  %v774 = vunpack.c.l.b16 %v407
  %v775 = vunpack.c.h.b16 %v407
  %v776 = vunpack.c.l.b16 %v408
  %v777 = vunpack.c.h.b16 %v408
  %v778 = vunpack.c.l.b16 %v409
  %v779 = vunpack.c.h.b16 %v409
  %v780 = vunpack.c.l.b16 %v410
  %v781 = vunpack.c.h.b16 %v410
  %v782 = vunpack.c.l.b16 %v411
  %v783 = vunpack.c.h.b16 %v411
  %v784 = vunpack.c.l.b16 %v412
  %v785 = vunpack.c.h.b16 %v412
  %v786 = vunpack.c.l.b16 %v413
  %v787 = vunpack.c.h.b16 %v413
  %v788 = vunpack.c.l.b16 %v414
  %v789 = vunpack.c.h.b16 %v414
  %v790 = vunpack.c.l.b16 %v415
  %v791 = vunpack.c.h.b16 %v415
  %v792 = vunpack.c.l.b16 %v416
  %v793 = vunpack.c.h.b16 %v416
  %v794 = vunpack.c.l.b16 %v417
  %v795 = vunpack.c.h.b16 %v417
  %v796 = vunpack.c.l.b16 %v418
  %v797 = vunpack.c.h.b16 %v418
  %v798 = vunpack.c.l.b16 %v419
  %v799 = vunpack.c.h.b16 %v419
  %v800 = vunpack.c.l.b16 %v420
  %v801 = vunpack.c.h.b16 %v420
  %v802 = vunpack.c.l.b16 %v421
  %v803 = vunpack.c.h.b16 %v421
  %v804 = vunpack.c.l.b16 %v422
  %v805 = vunpack.c.h.b16 %v422
  %v806 = vunpack.c.l.b16 %v423
  %v807 = vunpack.c.h.b16 %v423
  %v808 = vpack.c.b16 %v560, %v552
  %v809 = vpack.c.b16 %v561, %v553
  %v810 = vpack.c.b16 %v562, %v554
  %v811 = vpack.c.b16 %v563, %v555
  %v812 = vpack.c.b16 %v564, %v556
  %v813 = vpack.c.b16 %v565, %v557
  %v814 = vpack.c.b16 %v566, %v558
  %v815 = vpack.c.b16 %v567, %v559
  %v816 = vpack.c.b16 %v576, %v568
  %v817 = vpack.c.b16 %v577, %v569
  %v818 = vpack.c.b16 %v578, %v570
  %v819 = vpack.c.b16 %v579, %v571
  %v820 = vpack.c.b16 %v580, %v572
  %v821 = vpack.c.b16 %v581, %v573
  %v822 = vpack.c.b16 %v582, %v574
  %v823 = vpack.c.b16 %v583, %v575
  %v824 = vpack.c.b16 %v592, %v584
  %v825 = vpack.c.b16 %v593, %v585
  %v826 = vpack.c.b16 %v594, %v586
  %v827 = vpack.c.b16 %v595, %v587
  %v828 = vpack.c.b16 %v596, %v588
  %v829 = vpack.c.b16 %v597, %v589
  %v830 = vpack.c.b16 %v598, %v590
  %v831 = vpack.c.b16 %v599, %v591
  %v832 = vpack.c.b16 %v608, %v600
  %v833 = vpack.c.b16 %v609, %v601
  %v834 = vpack.c.b16 %v610, %v602
  %v835 = vpack.c.b16 %v611, %v603
  %v836 = vpack.c.b16 %v612, %v604
  %v837 = vpack.c.b16 %v613, %v605
  %v838 = vpack.c.b16 %v614, %v606
  %v839 = vpack.c.b16 %v615, %v607
  %v840 = vpack.c.b16 %v624, %v616
  %v841 = vpack.c.b16 %v625, %v617
  %v842 = vpack.c.b16 %v626, %v618
  %v843 = vpack.c.b16 %v627, %v619
  %v844 = vpack.c.b16 %v628, %v620
  %v845 = vpack.c.b16 %v629, %v621
  %v846 = vpack.c.b16 %v630, %v622
  %v847 = vpack.c.b16 %v631, %v623
  %v848 = vpack.c.b16 %v640, %v632
  %v849 = vpack.c.b16 %v641, %v633
  %v850 = vpack.c.b16 %v642, %v634
  %v851 = vpack.c.b16 %v643, %v635
  %v852 = vpack.c.b16 %v644, %v636
  %v853 = vpack.c.b16 %v645, %v637
  %v854 = vpack.c.b16 %v646, %v638
  %v855 = vpack.c.b16 %v647, %v639
  %v856 = vpack.c.b16 %v656, %v648
  %v857 = vpack.c.b16 %v657, %v649
  %v858 = vpack.c.b16 %v658, %v650
  %v859 = vpack.c.b16 %v659, %v651
  %v860 = vpack.c.b16 %v660, %v652
  %v861 = vpack.c.b16 %v661, %v653
  %v862 = vpack.c.b16 %v662, %v654
  %v863 = vpack.c.b16 %v663, %v655
  %v864 = vpack.c.b16 %v672, %v664
  %v865 = vpack.c.b16 %v673, %v665
  %v866 = vpack.c.b16 %v674, %v666
  %v867 = vpack.c.b16 %v675, %v667
  %v868 = vpack.c.b16 %v676, %v668
  %v869 = vpack.c.b16 %v677, %v669
  %v870 = vpack.c.b16 %v678, %v670
  %v871 = vpack.c.b16 %v679, %v671
  %v872 = vpack.c.b16 %v688, %v680
  %v873 = vpack.c.b16 %v689, %v681
  %v874 = vpack.c.b16 %v690, %v682
  %v875 = vpack.c.b16 %v691, %v683
  %v876 = vpack.c.b16 %v692, %v684
  %v877 = vpack.c.b16 %v693, %v685
  %v878 = vpack.c.b16 %v694, %v686
  %v879 = vpack.c.b16 %v695, %v687
  %v880 = vpack.c.b16 %v704, %v696
  %v881 = vpack.c.b16 %v705, %v697
  %v882 = vpack.c.b16 %v706, %v698
  %v883 = vpack.c.b16 %v707, %v699
  %v884 = vpack.c.b16 %v708, %v700
  %v885 = vpack.c.b16 %v709, %v701
  %v886 = vpack.c.b16 %v710, %v702
  %v887 = vpack.c.b16 %v711, %v703
  %v888 = vpack.c.b16 %v720, %v712
  %v889 = vpack.c.b16 %v721, %v713
  %v890 = vpack.c.b16 %v722, %v714
  %v891 = vpack.c.b16 %v723, %v715
  %v892 = vpack.c.b16 %v724, %v716
  %v893 = vpack.c.b16 %v725, %v717
  %v894 = vpack.c.b16 %v726, %v718
  %v895 = vpack.c.b16 %v727, %v719
  %v896 = vpack.c.b16 %v736, %v728
  %v897 = vpack.c.b16 %v737, %v729
  %v898 = vpack.c.b16 %v738, %v730
  %v899 = vpack.c.b16 %v739, %v731
  %v900 = vpack.c.b16 %v740, %v732
  %v901 = vpack.c.b16 %v741, %v733
  %v902 = vpack.c.b16 %v742, %v734
  %v903 = vpack.c.b16 %v743, %v735
  %v904 = vpack.c.b16 %v752, %v744
  %v905 = vpack.c.b16 %v753, %v745
  %v906 = vpack.c.b16 %v754, %v746
  %v907 = vpack.c.b16 %v755, %v747
  %v908 = vpack.c.b16 %v756, %v748
  %v909 = vpack.c.b16 %v757, %v749
  %v910 = vpack.c.b16 %v758, %v750
  %v911 = vpack.c.b16 %v759, %v751
  %v912 = vpack.c.b16 %v768, %v760
  %v913 = vpack.c.b16 %v769, %v761
  %v914 = vpack.c.b16 %v770, %v762
  %v915 = vpack.c.b16 %v771, %v763
  %v916 = vpack.c.b16 %v772, %v764
  %v917 = vpack.c.b16 %v773, %v765
  %v918 = vpack.c.b16 %v774, %v766
  %v919 = vpack.c.b16 %v775, %v767
  %v920 = vpack.c.b16 %v784, %v776
  %v921 = vpack.c.b16 %v785, %v777
  %v922 = vpack.c.b16 %v786, %v778
  %v923 = vpack.c.b16 %v787, %v779
  %v924 = vpack.c.b16 %v788, %v780
  %v925 = vpack.c.b16 %v789, %v781
  %v926 = vpack.c.b16 %v790, %v782
  %v927 = vpack.c.b16 %v791, %v783
  %v928 = vpack.c.b16 %v800, %v792
  %v929 = vpack.c.b16 %v801, %v793
  %v930 = vpack.c.b16 %v802, %v794
  %v931 = vpack.c.b16 %v803, %v795
  %v932 = vpack.c.b16 %v804, %v796
  %v933 = vpack.c.b16 %v805, %v797
  %v934 = vpack.c.b16 %v806, %v798
  %v935 = vpack.c.b16 %v807, %v799
  %1064 = vmatprep.subr.bf16.mxu0 %v865
  %1065 = vmatpush1.bf16.msra.mxu0 %v864
  %1066 = vmatprep.subr.bf16.mxu0 %v857
  %1067 = vmatpush1.bf16.msra.mxu0 %v856
  %1068 = vmatprep.subr.bf16.mxu0 %v849
  %1069 = vmatpush1.bf16.msra.mxu0 %v848
  %1070 = vmatprep.subr.bf16.mxu0 %v841
  %1071 = vmatpush1.bf16.msra.mxu0 %v840
  %1072 = vmatprep.subr.bf16.mxu0 %v833
  %1073 = vmatpush1.bf16.msra.mxu0 %v832
  %1074 = vmatprep.subr.bf16.mxu0 %v825
  %1075 = vmatpush1.bf16.msra.mxu0 %v824
  %1076 = vmatprep.subr.bf16.mxu0 %v817
  %1077 = vmatpush1.bf16.msra.mxu0 %v816
  %1078 = vmatprep.subr.bf16.mxu0 %v809
  %1079 = vmatpush1.bf16.msra.mxu0 %v808
  %1080 = vmatprep.subr.bf16.mxu0 %v929
  %1081 = vmatpush2.bf16.msra.mxu0 %v928
  %1082 = vmatprep.subr.bf16.mxu0 %v921
  %1083 = vmatpush2.bf16.msra.mxu0 %v920
  %1084 = vmatprep.subr.bf16.mxu0 %v913
  %1085 = vmatpush2.bf16.msra.mxu0 %v912
  %1086 = vmatprep.subr.bf16.mxu0 %v905
  %1087 = vmatpush2.bf16.msra.mxu0 %v904
  %1088 = vmatprep.subr.bf16.mxu0 %v897
  %1089 = vmatpush2.bf16.msra.mxu0 %v896
  %1090 = vmatprep.subr.bf16.mxu0 %v889
  %1091 = vmatpush2.bf16.msra.mxu0 %v888
  %1092 = vmatprep.subr.bf16.mxu0 %v881
  %1093 = vmatpush2.bf16.msra.mxu0 %v880
  %1094 = vmatprep.subr.bf16.mxu0 %v873
  %1095 = vmatpush2.bf16.msra.mxu0 %v872
  %1096 = vmatprep.mubr.bf16.mxu0 %v295
  %1097 = vmatmul.mubr.bf16.gmra.mxu0 %v294
  %v1098 = vpop.f32.mrf.mxu0
  %v1099 = vadd.f32 0.0, %v1098
  %v1100 = vpop.f32.mrf.mxu0
  %v1101 = vadd.f32 0.0, %v1100
  %v1102 = vpop.f32.mrf.mxu0
  %v1103 = vadd.f32 0.0, %v1102
  %v1104 = vpop.f32.mrf.mxu0
  %v1105 = vadd.f32 0.0, %v1104
  %1106 = vdwg.mxu0
  %1107 = vmatprep.subr.bf16.mxu0 %v867
  %1108 = vmatpush1.bf16.msra.mxu0 %v866
  %1109 = vmatprep.subr.bf16.mxu0 %v859
  %1110 = vmatpush1.bf16.msra.mxu0 %v858
  %1111 = vmatprep.subr.bf16.mxu0 %v851
  %1112 = vmatpush1.bf16.msra.mxu0 %v850
  %1113 = vmatprep.subr.bf16.mxu0 %v843
  %1114 = vmatpush1.bf16.msra.mxu0 %v842
  %1115 = vmatprep.subr.bf16.mxu0 %v835
  %1116 = vmatpush1.bf16.msra.mxu0 %v834
  %1117 = vmatprep.subr.bf16.mxu0 %v827
  %1118 = vmatpush1.bf16.msra.mxu0 %v826
  %1119 = vmatprep.subr.bf16.mxu0 %v819
  %1120 = vmatpush1.bf16.msra.mxu0 %v818
  %1121 = vmatprep.subr.bf16.mxu0 %v811
  %1122 = vmatpush1.bf16.msra.mxu0 %v810
  %1123 = vmatprep.subr.bf16.mxu0 %v931
  %1124 = vmatpush2.bf16.msra.mxu0 %v930
  %1125 = vmatprep.subr.bf16.mxu0 %v923
  %1126 = vmatpush2.bf16.msra.mxu0 %v922
  %1127 = vmatprep.subr.bf16.mxu0 %v915
  %1128 = vmatpush2.bf16.msra.mxu0 %v914
  %1129 = vmatprep.subr.bf16.mxu0 %v907
  %1130 = vmatpush2.bf16.msra.mxu0 %v906
  %1131 = vmatprep.subr.bf16.mxu0 %v899
  %1132 = vmatpush2.bf16.msra.mxu0 %v898
  %1133 = vmatprep.subr.bf16.mxu0 %v891
  %1134 = vmatpush2.bf16.msra.mxu0 %v890
  %1135 = vmatprep.subr.bf16.mxu0 %v883
  %1136 = vmatpush2.bf16.msra.mxu0 %v882
  %1137 = vmatprep.subr.bf16.mxu0 %v875
  %1138 = vmatpush2.bf16.msra.mxu0 %v874
  %1139 = vmatprep.mubr.bf16.mxu0 %v295
  %1140 = vmatmul.mubr.bf16.gmra.mxu0 %v294
  %v1141 = vpop.f32.mrf.mxu0
  %v1142 = vadd.f32 0.0, %v1141
  %v1143 = vpop.f32.mrf.mxu0
  %v1144 = vadd.f32 0.0, %v1143
  %v1145 = vpop.f32.mrf.mxu0
  %v1146 = vadd.f32 0.0, %v1145
  %v1147 = vpop.f32.mrf.mxu0
  %v1148 = vadd.f32 0.0, %v1147
  %1149 = vdwg.mxu0
  %1150 = vmatprep.subr.bf16.mxu0 %v869
  %1151 = vmatpush1.bf16.msra.mxu0 %v868
  %1152 = vmatprep.subr.bf16.mxu0 %v861
  %1153 = vmatpush1.bf16.msra.mxu0 %v860
  %1154 = vmatprep.subr.bf16.mxu0 %v853
  %1155 = vmatpush1.bf16.msra.mxu0 %v852
  %1156 = vmatprep.subr.bf16.mxu0 %v845
  %1157 = vmatpush1.bf16.msra.mxu0 %v844
  %1158 = vmatprep.subr.bf16.mxu0 %v837
  %1159 = vmatpush1.bf16.msra.mxu0 %v836
  %1160 = vmatprep.subr.bf16.mxu0 %v829
  %1161 = vmatpush1.bf16.msra.mxu0 %v828
  %1162 = vmatprep.subr.bf16.mxu0 %v821
  %1163 = vmatpush1.bf16.msra.mxu0 %v820
  %1164 = vmatprep.subr.bf16.mxu0 %v813
  %1165 = vmatpush1.bf16.msra.mxu0 %v812
  %1166 = vmatprep.subr.bf16.mxu0 %v933
  %1167 = vmatpush2.bf16.msra.mxu0 %v932
  %1168 = vmatprep.subr.bf16.mxu0 %v925
  %1169 = vmatpush2.bf16.msra.mxu0 %v924
  %1170 = vmatprep.subr.bf16.mxu0 %v917
  %1171 = vmatpush2.bf16.msra.mxu0 %v916
  %1172 = vmatprep.subr.bf16.mxu0 %v909
  %1173 = vmatpush2.bf16.msra.mxu0 %v908
  %1174 = vmatprep.subr.bf16.mxu0 %v901
  %1175 = vmatpush2.bf16.msra.mxu0 %v900
  %1176 = vmatprep.subr.bf16.mxu0 %v893
  %1177 = vmatpush2.bf16.msra.mxu0 %v892
  %1178 = vmatprep.subr.bf16.mxu0 %v885
  %1179 = vmatpush2.bf16.msra.mxu0 %v884
  %1180 = vmatprep.subr.bf16.mxu0 %v877
  %1181 = vmatpush2.bf16.msra.mxu0 %v876
  %1182 = vmatprep.mubr.bf16.mxu0 %v295
  %1183 = vmatmul.mubr.bf16.gmra.mxu0 %v294
  %v1184 = vpop.f32.mrf.mxu0
  %v1185 = vadd.f32 0.0, %v1184
  %v1186 = vpop.f32.mrf.mxu0
  %v1187 = vadd.f32 0.0, %v1186
  %v1188 = vpop.f32.mrf.mxu0
  %v1189 = vadd.f32 0.0, %v1188
  %v1190 = vpop.f32.mrf.mxu0
  %v1191 = vadd.f32 0.0, %v1190
  %1192 = vdwg.mxu0
  %1193 = vmatprep.subr.bf16.mxu0 %v871
  %1194 = vmatpush1.bf16.msra.mxu0 %v870
  %1195 = vmatprep.subr.bf16.mxu0 %v863
  %1196 = vmatpush1.bf16.msra.mxu0 %v862
  %1197 = vmatprep.subr.bf16.mxu0 %v855
  %1198 = vmatpush1.bf16.msra.mxu0 %v854
  %1199 = vmatprep.subr.bf16.mxu0 %v847
  %1200 = vmatpush1.bf16.msra.mxu0 %v846
  %1201 = vmatprep.subr.bf16.mxu0 %v839
  %1202 = vmatpush1.bf16.msra.mxu0 %v838
  %1203 = vmatprep.subr.bf16.mxu0 %v831
  %1204 = vmatpush1.bf16.msra.mxu0 %v830
  %1205 = vmatprep.subr.bf16.mxu0 %v823
  %1206 = vmatpush1.bf16.msra.mxu0 %v822
  %1207 = vmatprep.subr.bf16.mxu0 %v815
  %1208 = vmatpush1.bf16.msra.mxu0 %v814
  %1209 = vmatprep.subr.bf16.mxu0 %v935
  %1210 = vmatpush2.bf16.msra.mxu0 %v934
  %1211 = vmatprep.subr.bf16.mxu0 %v927
  %1212 = vmatpush2.bf16.msra.mxu0 %v926
  %1213 = vmatprep.subr.bf16.mxu0 %v919
  %1214 = vmatpush2.bf16.msra.mxu0 %v918
  %1215 = vmatprep.subr.bf16.mxu0 %v911
  %1216 = vmatpush2.bf16.msra.mxu0 %v910
  %1217 = vmatprep.subr.bf16.mxu0 %v903
  %1218 = vmatpush2.bf16.msra.mxu0 %v902
  %1219 = vmatprep.subr.bf16.mxu0 %v895
  %1220 = vmatpush2.bf16.msra.mxu0 %v894
  %1221 = vmatprep.subr.bf16.mxu0 %v887
  %1222 = vmatpush2.bf16.msra.mxu0 %v886
  %1223 = vmatprep.subr.bf16.mxu0 %v879
  %1224 = vmatpush2.bf16.msra.mxu0 %v878
  %1225 = vmatprep.mubr.bf16.mxu0 %v295
  %1226 = vmatmul.mubr.bf16.gmra.mxu0 %v294
  %v1227 = vpop.f32.mrf.mxu0
  %v1228 = vadd.f32 0.0, %v1227
  %v1229 = vpop.f32.mrf.mxu0
  %v1230 = vadd.f32 0.0, %v1229
  %v1231 = vpop.f32.mrf.mxu0
  %v1232 = vadd.f32 0.0, %v1231
  %v1233 = vpop.f32.mrf.mxu0
  %v1234 = vadd.f32 0.0, %v1233
  %1235 = vdwg.mxu0
  %1236 = vst [vmem:[%s4] sm:$0xff] %v1099
  %1237 = vst [vmem:[%s4 + $0x8] sm:$0xff] %v1101
  %1238 = vst [vmem:[%s4 + $0x10] sm:$0xff] %v1142
  %1239 = vst [vmem:[%s4 + $0x18] sm:$0xff] %v1144
  %1240 = vst [vmem:[%s4 + $0x20] sm:$0xff] %v1185
  %1241 = vst [vmem:[%s4 + $0x28] sm:$0xff] %v1187
  %1242 = vst [vmem:[%s4 + $0x30] sm:$0xff] %v1228
  %1243 = vst [vmem:[%s4 + $0x38] sm:$0xff] %v1230
  %1244 = vst [vmem:[%s4 + $0x40] sm:$0xff] %v1103
  %1245 = vst [vmem:[%s4 + $0x48] sm:$0xff] %v1105
  %1246 = vst [vmem:[%s4 + $0x50] sm:$0xff] %v1146
  %1247 = vst [vmem:[%s4 + $0x58] sm:$0xff] %v1148
  %1248 = vst [vmem:[%s4 + $0x60] sm:$0xff] %v1189
  %1249 = vst [vmem:[%s4 + $0x68] sm:$0xff] %v1191
  %1250 = vst [vmem:[%s4 + $0x70] sm:$0xff] %v1232
  %1251 = vst [vmem:[%s4 + $0x78] sm:$0xff] %v1234
  // Predicated region
  $region18: #{resize_and_classify.1} parent=0 // pred_check
    _
  $region19: #{resize_and_classify.1} parent=0 // pred_check_branch
    %1253 = sbr.rel (0) target = $region21
  $region20: #{resize_and_classify.1} parent=0 // pred_region
    _
  $region21: #{resize_and_classify.1} parent=0 // pred_fallthru
    _
  // Predicated region
  $region22: #{resize_and_classify.1} parent=0 // pred_check
    _
  $region23: #{resize_and_classify.1} parent=0 // pred_check_branch
    %1255 = sbr.rel (0) target = $region25
  $region24: #{resize_and_classify.1} parent=0 // pred_region
    _
  $region25: #{resize_and_classify.1} parent=0 // pred_fallthru
    _

</llo_original>
